<compile_context>
chip_gen: v5e
topology: v5e:2x2
jax: 0.10.0
libtpu: 0.0.40
codegen_flags: <defaults>
</compile_context>

<pallas_src>
import functools

import jax
import jax.numpy as jnp
from jax.experimental import pallas as pl
from jax.experimental.pallas import tpu as pltpu


# ---------------------------------------------------------------------------
# Tile helper: largest multiple-of-8 divisor of `total` <= max_tile that yields
# >= min_steps grid steps (so v7x's 2 TensorCores both get work); falls back to
# the full extent (grid of 1, no partial / out-of-bounds blocks).
# ---------------------------------------------------------------------------
def _pick_tile(total, max_tile, min_steps=2):
    best = None
    t = 8
    limit = min(total, max_tile)
    while t <= limit:
        if total % t == 0 and total // t >= min_steps:
            best = t
        t += 8
    return best if best is not None else total


# ---------------------------------------------------------------------------
# Kernel 1: tiled fused matmul + bias (+ReLU)      (conv1 im2col matmul)
# ---------------------------------------------------------------------------
def _matmul_bias_act_kernel(x_ref, w_ref, b_ref, o_ref, *, relu):
    acc = jnp.dot(x_ref[...], w_ref[...], preferred_element_type=jnp.float32)
    acc = acc + b_ref[...]                       # (1, N) broadcast over rows, f32
    if relu:
        acc = jnp.maximum(acc, 0.0)
    o_ref[...] = acc.astype(o_ref.dtype)


def matmul_bias_act(x, w, b, *, relu=False, out_dtype=jnp.float32, tile_m=1024):
    """y = x @ w + b (+ReLU).  x:(M,K), w:(K,N), b:(N,).  M is grid-tiled."""
    M, K = x.shape
    N = w.shape[1]
    tm = _pick_tile(M, tile_m, min_steps=2)
    grid = (pl.cdiv(M, tm),)
    flops = 2 * M * K * N
    bytes_accessed = ((M * K + K * N) * x.dtype.itemsize
                      + M * N * jnp.dtype(out_dtype).itemsize)
    return pl.pallas_call(
        functools.partial(_matmul_bias_act_kernel, relu=relu),
        out_shape=jax.ShapeDtypeStruct((M, N), out_dtype),
        grid=grid,
        in_specs=[
            pl.BlockSpec((tm, K), lambda i: (i, 0)),
            pl.BlockSpec((K, N), lambda i: (0, 0)),
            pl.BlockSpec((1, N), lambda i: (0, 0)),
        ],
        out_specs=pl.BlockSpec((tm, N), lambda i: (i, 0)),
        compiler_params=pltpu.CompilerParams(dimension_semantics=("parallel",)),
        cost_estimate=pl.CostEstimate(flops=flops, transcendentals=0,
                                      bytes_accessed=bytes_accessed),
    )(x, w, b.reshape(1, N))


# ---------------------------------------------------------------------------
# Kernel 2: conv2 matmul + bias + ReLU + global-avg-pool + fc  (all fused)
# ---------------------------------------------------------------------------
def _conv_pool_fc_kernel(cols_ref, w_ref, b_ref, fcw_ref, fcb_ref, o_ref, *, hw):
    y = jnp.dot(cols_ref[...], w_ref[...], preferred_element_type=jnp.float32)
    y = jnp.maximum(y + b_ref[...], 0.0)                       # (tb*hw, C2), f32
    tb = o_ref.shape[0]
    c2 = y.shape[1]
    # Global average pool: layout-preserving reshape + sublane reduce.
    pooled = jnp.sum(y.reshape(tb, hw, c2), axis=1) * (1.0 / hw)      # (tb, C2)
    feat = jnp.dot(pooled, fcw_ref[...], preferred_element_type=jnp.float32)
    o_ref[...] = (feat + fcb_ref[...]).astype(o_ref.dtype)


def conv_pool_fc(cols, w, b, fc_w, fc_b, *, batch, hw, tile_b=128):
    """cols:(batch*hw, K) -> conv matmul -> ReLU -> mean over hw -> fc -> (batch, E)."""
    M, K = cols.shape
    C2 = w.shape[1]
    E = fc_w.shape[1]
    # VMEM-aware batch-tile cap: double-buffered bf16 cols block + f32 conv output.
    per_img = 2 * hw * K * cols.dtype.itemsize + hw * C2 * 4
    budget = 8 * 1024 * 1024
    cap = max(8, budget // max(per_img, 1))
    tb = _pick_tile(batch, min(tile_b, cap), min_steps=2)
    grid = (pl.cdiv(batch, tb),)
    flops = 2 * M * K * C2 + batch * hw * C2 + 2 * batch * C2 * E
    bytes_accessed = ((M * K + K * C2) * cols.dtype.itemsize
                      + (C2 * E + batch * E) * 4)
    return pl.pallas_call(
        functools.partial(_conv_pool_fc_kernel, hw=hw),
        out_shape=jax.ShapeDtypeStruct((batch, E), jnp.float32),
        grid=grid,
        in_specs=[
            pl.BlockSpec((tb * hw, K), lambda i: (i, 0)),
            pl.BlockSpec((K, C2), lambda i: (0, 0)),
            pl.BlockSpec((1, C2), lambda i: (0, 0)),
            pl.BlockSpec((C2, E), lambda i: (0, 0)),
            pl.BlockSpec((1, E), lambda i: (0, 0)),
        ],
        out_specs=pl.BlockSpec((tb, E), lambda i: (i, 0)),
        compiler_params=pltpu.CompilerParams(
            dimension_semantics=("parallel",),
            vmem_limit_bytes=32 * 1024 * 1024),
        cost_estimate=pl.CostEstimate(flops=flops, transcendentals=0,
                                      bytes_accessed=bytes_accessed),
    )(cols, w, b.reshape(1, C2), fc_w, fc_b.reshape(1, E))


# ---------------------------------------------------------------------------
# Kernel 3: projector + L2-normalize(O) + coherence + 2-layer classifier (fused)
# ---------------------------------------------------------------------------
def _tail_kernel(x_ref, pw_ref, pb_ref, w1_ref, b1_ref, w2_ref, b2_ref,
                 logit_ref, pn_ref, *, osc_dim):
    eps = 1e-12  # F.normalize semantics: x / max(||x||_2, eps)
    E = pn_ref.shape[-1]

    def project_and_normalize(x, half):
        # ONE lane-dense (tb, E) @ (E, O*E) projection (oscillator components are
        # contiguous lane groups of the grouped weight), bf16 MXU + f32 acc.
        y = jnp.dot(x, pw_ref[...], preferred_element_type=jnp.float32) + pb_ref[...]
        comps = [y[:, o * E:(o + 1) * E] for o in range(osc_dim)]   # static lane slices
        nsq = comps[0] * comps[0]
        for o in range(1, osc_dim):
            nsq = nsq + comps[o] * comps[o]
        inv = jax.lax.rsqrt(jnp.maximum(nsq, eps * eps))   # EUP rsqrt (free slot)
        normed = []
        for o in range(osc_dim):
            qn = comps[o] * inv
            pn_ref[half, o] = qn                           # lane-dense (tb, E) store
            normed.append(qn)
        return normed

    a = project_and_normalize(x_ref[0], 0)
    b = project_and_normalize(x_ref[1], 1)

    coh = a[0] * b[0]                                # coherence[b, e] = sum_o a_o * b_o
    for o in range(1, osc_dim):
        coh = coh + a[o] * b[o]

    h = jnp.dot(coh.astype(w1_ref.dtype), w1_ref[...],
                preferred_element_type=jnp.float32) + b1_ref[...]
    h = jnp.maximum(h, 0.0)                          # (tb, 64)
    # Final Linear(64 -> 1) as VPU multiply + lane reduce (avoids N=1 MXU matmul).
    logit_ref[...] = jnp.sum(h * w2_ref[...], axis=-1, keepdims=True) + b2_ref[...]


def fused_projector_coherence_classifier(feats, params, *, batch, oscillator_dim,
                                         tile_b=256):
    """feats: (2*batch, E) f32, rows [img1 ; img2]."""
    B = batch
    E = feats.shape[-1]
    O = oscillator_dim
    H = params["cls1_w"].shape[1]

    # Group projector columns per oscillator component so every component is a
    # contiguous lane slice: kernel column o*E + e  <-  PyTorch column e*O + o.
    pw = params["proj_w"].reshape(E, E, O).transpose(0, 2, 1).reshape(E, O * E)
    pb = params["proj_b"].reshape(E, O).T.reshape(1, O * E)

    feats2 = feats.reshape(2, B, E).astype(jnp.bfloat16)   # [img1 ; img2], bf16 MXU input

    tb = _pick_tile(B, tile_b, min_steps=2)
    grid = (pl.cdiv(B, tb),)

    logit, pn = pl.pallas_call(
        functools.partial(_tail_kernel, osc_dim=O),
        out_shape=(
            jax.ShapeDtypeStruct((B, 1), jnp.float32),
            jax.ShapeDtypeStruct((2, O, B, E), jnp.float32),
        ),
        grid=grid,
        in_specs=[
            pl.BlockSpec((2, tb, E), lambda i: (0, i, 0)),
            pl.BlockSpec((E, O * E), lambda i: (0, 0)),
            pl.BlockSpec((1, O * E), lambda i: (0, 0)),
            pl.BlockSpec((E, H), lambda i: (0, 0)),
            pl.BlockSpec((1, H), lambda i: (0, 0)),
            pl.BlockSpec((1, H), lambda i: (0, 0)),
            pl.BlockSpec((1, 1), lambda i: (0, 0)),
        ],
        out_specs=(
            pl.BlockSpec((tb, 1), lambda i: (i, 0)),
            pl.BlockSpec((2, O, tb, E), lambda i: (0, 0, i, 0)),
        ),
        compiler_params=pltpu.CompilerParams(dimension_semantics=("parallel",)),
    )(feats2, pw.astype(jnp.bfloat16), pb,
      params["cls1_w"].astype(jnp.bfloat16), params["cls1_b"].reshape(1, H),
      params["cls2_w"].reshape(1, H), params["cls2_b"].reshape(1, 1))

    # (2, O, B, E) lane-dense slabs -> PyTorch (B, E, O); tiny XLA transpose only.
    p1 = jnp.moveaxis(pn[0], 0, -1)
    p2 = jnp.moveaxis(pn[1], 0, -1)
    return logit, p1, p2


# ---------------------------------------------------------------------------
# Glue: im2col lowering for Conv2d (NHWC internally, stride, symmetric padding)
# ---------------------------------------------------------------------------
def im2col_nhwc(x, kh, kw, stride, pad):
    B, H, W, C = x.shape
    xp = jnp.pad(x, ((0, 0), (pad, pad), (pad, pad), (0, 0)))
    Ho = (H + 2 * pad - kh) // stride + 1
    Wo = (W + 2 * pad - kw) // stride + 1
    patches = []
    for i in range(kh):
        for j in range(kw):
            patches.append(xp[:, i:i + stride * Ho:stride, j:j + stride * Wo:stride, :])
    cols = jnp.stack(patches, axis=3)                    # (B, Ho, Wo, kh*kw, C)
    return cols.reshape(B * Ho * Wo, kh * kw * C), Ho, Wo


# ---------------------------------------------------------------------------
# Model
# ---------------------------------------------------------------------------
def init_params(key, input_channels=1, embedding_dim=64, oscillator_dim=2):
    ks = jax.random.split(key, 6)

    def dense(k, fan_in, shape):
        return jax.random.normal(k, shape, jnp.float32) / jnp.sqrt(fan_in)

    E, O = embedding_dim, oscillator_dim
    return {
        # FeatureExtractor
        "conv1_w": dense(ks[0], input_channels * 9, (16, input_channels, 3, 3)),
        "conv1_b": jnp.zeros((16,), jnp.float32),
        "conv2_w": dense(ks[1], 16 * 9, (32, 16, 3, 3)),
        "conv2_b": jnp.zeros((32,), jnp.float32),
        "fc_w": dense(ks[2], 32, (32, E)),
        "fc_b": jnp.zeros((E,), jnp.float32),
        # projector: Linear(E, E*O), stored (in, out)
        "proj_w": dense(ks[3], E, (E, E * O)),
        "proj_b": jnp.zeros((E * O,), jnp.float32),
        # classifier: Linear(E,64) -> ReLU -> Linear(64,1), stored (in, out)
        "cls1_w": dense(ks[4], E, (E, 64)),
        "cls1_b": jnp.zeros((64,), jnp.float32),
        "cls2_w": dense(ks[5], 64, (64, 1)),
        "cls2_b": jnp.zeros((1,), jnp.float32),
    }


def feature_extractor(imgs_nchw, params):
    """imgs: (N, Cin, H, W) -> (N, E).  conv->ReLU->conv->ReLU->gap->fc."""
    N = imgs_nchw.shape[0]
    # NHWC + bf16 once, so both im2col passes and the y1 round trip move 2-byte data.
    x = jnp.transpose(imgs_nchw, (0, 2, 3, 1)).astype(jnp.bfloat16)

    # conv1 (3x3, s2, p1) + ReLU : im2col + tiled fused matmul (bf16 in/out, f32 acc)
    w1 = params["conv1_w"]                               # (16, Cin, 3, 3)
    cols1, Ho1, Wo1 = im2col_nhwc(x, 3, 3, 2, 1)         # (N*Ho1*Wo1, 9*Cin) bf16
    w1m = w1.transpose(2, 3, 1, 0).reshape(-1, w1.shape[0]).astype(jnp.bfloat16)
    y1 = matmul_bias_act(cols1, w1m, params["conv1_b"], relu=True,
                         out_dtype=jnp.bfloat16)         # (N*Ho1*Wo1, 16) bf16
    y1 = y1.reshape(N, Ho1, Wo1, w1.shape[0])            # NHWC, no transpose needed

    # conv2 (3x3, s2, p1) + ReLU + global-avg-pool + fc : one fused kernel
    w2 = params["conv2_w"]                               # (32, 16, 3, 3)
    cols2, Ho2, Wo2 = im2col_nhwc(y1, 3, 3, 2, 1)        # (N*Ho2*Wo2, 144) bf16
    w2m = w2.transpose(2, 3, 1, 0).reshape(-1, w2.shape[0]).astype(jnp.bfloat16)
    feats = conv_pool_fc(cols2, w2m, params["conv2_b"], params["fc_w"],
                         params["fc_b"], batch=N, hw=Ho2 * Wo2)
    return feats                                         # (N, E) f32


def baseline_same_diff_forward(img1, img2, params,
                               embedding_dim=64, oscillator_dim=2, alpha=1.0):
    del alpha  # unused, kept for API compatibility with the PyTorch module
    B = img1.shape[0]

    # Batch-concat the two images: a single pass through the shared-weight extractor.
    feats = feature_extractor(jnp.concatenate([img1, img2], axis=0), params)  # (2B, E)

    logit, p1n, p2n = fused_projector_coherence_classifier(
        feats, params, batch=B, oscillator_dim=oscillator_dim)

    return logit, (p1n, p2n, [p1n], [p2n], None, None, None)


# ---------------------------------------------------------------------------
if __name__ == "__main__":
    key = jax.random.PRNGKey(0)
    k_in1, k_in2, k_par = jax.random.split(key, 3)

    B, C, H, W = 2, 1, 16, 16
    img1 = jax.random.normal(k_in1, (B, C, H, W), jnp.float32)
    img2 = jax.random.normal(k_in2, (B, C, H, W), jnp.float32)

    params = init_params(k_par, input_channels=C, embedding_dim=64, oscillator_dim=2)

    fwd = jax.jit(lambda a, b, p: baseline_same_diff_forward(a, b, p))
    logit, aux = fwd(img1, img2, params)
    jax.block_until_ready(logit)
    jax.block_until_ready(aux[0])
    jax.block_until_ready(aux[1])

    assert logit.shape == (B, 1)
    assert aux[0].shape == (B, 64, 2) and aux[1].shape == (B, 64, 2)
    assert bool(jnp.all(jnp.isfinite(logit)))
    assert bool(jnp.all(jnp.isfinite(aux[0]))) and bool(jnp.all(jnp.isfinite(aux[1])))
    print("KERNEL_OK")
</pallas_src>

<mosaic_0001>
module attributes {stable_mosaic.version = 11 : i64} {
  func.func @_matmul_bias_act_kernel(%arg0: i32, %arg1: memref<128x9xbf16, #tpu.memory_space<vmem>>, %arg2: memref<9x16xbf16, #tpu.memory_space<vmem>>, %arg3: memref<1x16xf32, #tpu.memory_space<vmem>>, %arg4: memref<128x16xbf16, #tpu.memory_space<vmem>>) attributes {dimension_semantics = [#tpu.dimension_semantics<parallel>], iteration_bounds = array<i64: 2>, scalar_prefetch = 0 : i64, scratch_operands = 0 : i64, tpu.core_type = #tpu.core_type<tc>, window_params = [{transform_indices = @transform_0, window_bounds = array<i64: 128, 9>}, {pipeline_mode = #tpu.pipeline_mode<synchronous>, transform_indices = @transform_1, window_bounds = array<i64: 9, 16>}, {pipeline_mode = #tpu.pipeline_mode<synchronous>, transform_indices = @transform_2, window_bounds = array<i64: 1, 16>}, {transform_indices = @transform_3, window_bounds = array<i64: 128, 16>}]} {
    %c0 = arith.constant 0 : index
    %c0_0 = arith.constant 0 : index
    %0 = vector.load %arg1[%c0, %c0_0] : memref<128x9xbf16, #tpu.memory_space<vmem>>, vector<128x9xbf16>
    %c0_1 = arith.constant 0 : index
    %c0_2 = arith.constant 0 : index
    %1 = vector.load %arg2[%c0_1, %c0_2] : memref<9x16xbf16, #tpu.memory_space<vmem>>, vector<9x16xbf16>
    %cst = arith.constant dense<0.000000e+00> : vector<128x16xf32>
    %2 = tpu.matmul %0, %1, %cst {dimension_numbers = #tpu.dot_dimension_numbers<[1], [0], [0], [1], [0, 0, 1, 1], [], []>} : vector<128x9xbf16>, vector<9x16xbf16>, vector<128x16xf32> -> vector<128x16xf32>
    %c0_3 = arith.constant 0 : index
    %c0_4 = arith.constant 0 : index
    %3 = vector.load %arg3[%c0_3, %c0_4] : memref<1x16xf32, #tpu.memory_space<vmem>>, vector<1x16xf32>
    %4 = vector.broadcast %3 : vector<1x16xf32> to vector<128x16xf32>
    %5 = arith.addf %2, %4 : vector<128x16xf32>
    %cst_5 = arith.constant 0.000000e+00 : f32
    %6 = vector.broadcast %cst_5 : f32 to vector<128x16xf32>
    %7 = arith.maximumf %5, %6 : vector<128x16xf32>
    %8 = arith.truncf %7 : vector<128x16xf32> to vector<128x16xbf16>
    %c0_6 = arith.constant 0 : index
    %c0_7 = arith.constant 0 : index
    %9 = vector.load %arg4[%c0_6, %c0_7] : memref<128x16xbf16, #tpu.memory_space<vmem>>, vector<128x16xbf16>
    tpu.vector_store %arg4[%c0_6, %c0_7], %8 {strides = array<i32>} : memref<128x16xbf16, #tpu.memory_space<vmem>>, vector<128x16xbf16>,
    return
  }
  func.func @transform_0(%arg0: i32) -> (i32, i32) {
    %c0_i32 = arith.constant 0 : i32
    %c0_i32_0 = arith.constant 0 : i32
    return %arg0, %c0_i32 : i32, i32
  }
  func.func @transform_1(%arg0: i32) -> (i32, i32) {
    %c0_i32 = arith.constant 0 : i32
    %c0_i32_0 = arith.constant 0 : i32
    %c0_i32_1 = arith.constant 0 : i32
    return %c0_i32, %c0_i32_0 : i32, i32
  }
  func.func @transform_2(%arg0: i32) -> (i32, i32) {
    %c0_i32 = arith.constant 0 : i32
    %c0_i32_0 = arith.constant 0 : i32
    %c0_i32_1 = arith.constant 0 : i32
    return %c0_i32, %c0_i32_0 : i32, i32
  }
  func.func @transform_3(%arg0: i32) -> (i32, i32) {
    %c0_i32 = arith.constant 0 : i32
    %c0_i32_0 = arith.constant 0 : i32
    return %arg0, %c0_i32 : i32, i32
  }
}

module attributes {stable_mosaic.version = 11 : i64} {
  func.func @_conv_pool_fc_kernel(%arg0: i32, %arg1: memref<64x144xbf16, #tpu.memory_space<vmem>>, %arg2: memref<144x32xbf16, #tpu.memory_space<vmem>>, %arg3: memref<1x32xf32, #tpu.memory_space<vmem>>, %arg4: memref<32x64xf32, #tpu.memory_space<vmem>>, %arg5: memref<1x64xf32, #tpu.memory_space<vmem>>, %arg6: memref<4x64xf32, #tpu.memory_space<vmem>>) attributes {dimension_semantics = [#tpu.dimension_semantics<parallel>], iteration_bounds = array<i64: 1>, scalar_prefetch = 0 : i64, scratch_operands = 0 : i64, tpu.core_type = #tpu.core_type<tc>, window_params = [{transform_indices = @transform_0, window_bounds = array<i64: 64, 144>}, {pipeline_mode = #tpu.pipeline_mode<synchronous>, transform_indices = @transform_1, window_bounds = array<i64: 144, 32>}, {pipeline_mode = #tpu.pipeline_mode<synchronous>, transform_indices = @transform_2, window_bounds = array<i64: 1, 32>}, {pipeline_mode = #tpu.pipeline_mode<synchronous>, transform_indices = @transform_3, window_bounds = array<i64: 32, 64>}, {pipeline_mode = #tpu.pipeline_mode<synchronous>, transform_indices = @transform_4, window_bounds = array<i64: 1, 64>}, {transform_indices = @transform_5, window_bounds = array<i64: 4, 64>}]} {
    %c0 = arith.constant 0 : index
    %c0_0 = arith.constant 0 : index
    %0 = vector.load %arg1[%c0, %c0_0] : memref<64x144xbf16, #tpu.memory_space<vmem>>, vector<64x144xbf16>
    %c0_1 = arith.constant 0 : index
    %c0_2 = arith.constant 0 : index
    %1 = vector.load %arg2[%c0_1, %c0_2] : memref<144x32xbf16, #tpu.memory_space<vmem>>, vector<144x32xbf16>
    %cst = arith.constant dense<0.000000e+00> : vector<64x32xf32>
    %2 = tpu.matmul %0, %1, %cst {dimension_numbers = #tpu.dot_dimension_numbers<[1], [0], [0], [1], [0, 0, 1, 1], [], []>} : vector<64x144xbf16>, vector<144x32xbf16>, vector<64x32xf32> -> vector<64x32xf32>
    %c0_3 = arith.constant 0 : index
    %c0_4 = arith.constant 0 : index
    %3 = vector.load %arg3[%c0_3, %c0_4] : memref<1x32xf32, #tpu.memory_space<vmem>>, vector<1x32xf32>
    %4 = vector.broadcast %3 : vector<1x32xf32> to vector<64x32xf32>
    %5 = arith.addf %2, %4 : vector<64x32xf32>
    %cst_5 = arith.constant 0.000000e+00 : f32
    %6 = vector.broadcast %cst_5 : f32 to vector<64x32xf32>
    %7 = arith.maximumf %5, %6 : vector<64x32xf32>
    %8 = vector.shape_cast %7 : vector<64x32xf32> to vector<4x16x32xf32>
    %cst_6 = arith.constant dense<0.000000e+00> : vector<4x32xf32>
    %9 = vector.multi_reduction <add>, %8, %cst_6 [1] : vector<4x16x32xf32> to vector<4x32xf32>
    %cst_7 = arith.constant 6.250000e-02 : f32
    %10 = vector.broadcast %cst_7 : f32 to vector<4x32xf32>
    %11 = arith.mulf %9, %10 : vector<4x32xf32>
    %c0_8 = arith.constant 0 : index
    %c0_9 = arith.constant 0 : index
    %12 = vector.load %arg4[%c0_8, %c0_9] : memref<32x64xf32, #tpu.memory_space<vmem>>, vector<32x64xf32>
    %cst_10 = arith.constant dense<0.000000e+00> : vector<4x64xf32>
    %13 = tpu.matmul %11, %12, %cst_10 {dimension_numbers = #tpu.dot_dimension_numbers<[1], [0], [0], [1], [0, 0, 1, 1], [], []>} : vector<4x32xf32>, vector<32x64xf32>, vector<4x64xf32> -> vector<4x64xf32>
    %c0_11 = arith.constant 0 : index
    %c0_12 = arith.constant 0 : index
    %14 = vector.load %arg5[%c0_11, %c0_12] : memref<1x64xf32, #tpu.memory_space<vmem>>, vector<1x64xf32>
    %15 = vector.broadcast %14 : vector<1x64xf32> to vector<4x64xf32>
    %16 = arith.addf %13, %15 : vector<4x64xf32>
    %c0_13 = arith.constant 0 : index
    %c0_14 = arith.constant 0 : index
    %17 = vector.load %arg6[%c0_13, %c0_14] : memref<4x64xf32, #tpu.memory_space<vmem>>, vector<4x64xf32>
    tpu.vector_store %arg6[%c0_13, %c0_14], %16 {strides = array<i32>} : memref<4x64xf32, #tpu.memory_space<vmem>>, vector<4x64xf32>,
    return
  }
  func.func @transform_0(%arg0: i32) -> (i32, i32) {
    %c0_i32 = arith.constant 0 : i32
    %c0_i32_0 = arith.constant 0 : i32
    return %arg0, %c0_i32 : i32, i32
  }
  func.func @transform_1(%arg0: i32) -> (i32, i32) {
    %c0_i32 = arith.constant 0 : i32
    %c0_i32_0 = arith.constant 0 : i32
    %c0_i32_1 = arith.constant 0 : i32
    return %c0_i32, %c0_i32_0 : i32, i32
  }
  func.func @transform_2(%arg0: i32) -> (i32, i32) {
    %c0_i32 = arith.constant 0 : i32
    %c0_i32_0 = arith.constant 0 : i32
    %c0_i32_1 = arith.constant 0 : i32
    return %c0_i32, %c0_i32_0 : i32, i32
  }
  func.func @transform_3(%arg0: i32) -> (i32, i32) {
    %c0_i32 = arith.constant 0 : i32
    %c0_i32_0 = arith.constant 0 : i32
    %c0_i32_1 = arith.constant 0 : i32
    return %c0_i32, %c0_i32_0 : i32, i32
  }
  func.func @transform_4(%arg0: i32) -> (i32, i32) {
    %c0_i32 = arith.constant 0 : i32
    %c0_i32_0 = arith.constant 0 : i32
    %c0_i32_1 = arith.constant 0 : i32
    return %c0_i32, %c0_i32_0 : i32, i32
  }
  func.func @transform_5(%arg0: i32) -> (i32, i32) {
    %c0_i32 = arith.constant 0 : i32
    %c0_i32_0 = arith.constant 0 : i32
    return %arg0, %c0_i32 : i32, i32
  }
}

module attributes {stable_mosaic.version = 11 : i64} {
  func.func @_tail_kernel(%arg0: i32, %arg1: memref<2x2x64xbf16, #tpu.memory_space<vmem>>, %arg2: memref<64x128xbf16, #tpu.memory_space<vmem>>, %arg3: memref<1x128xf32, #tpu.memory_space<vmem>>, %arg4: memref<64x64xbf16, #tpu.memory_space<vmem>>, %arg5: memref<1x64xf32, #tpu.memory_space<vmem>>, %arg6: memref<1x64xf32, #tpu.memory_space<vmem>>, %arg7: memref<1x1xf32, #tpu.memory_space<vmem>>, %arg8: memref<2x1xf32, #tpu.memory_space<vmem>>, %arg9: memref<2x2x2x64xf32, #tpu.memory_space<vmem>>) attributes {dimension_semantics = [#tpu.dimension_semantics<parallel>], iteration_bounds = array<i64: 1>, scalar_prefetch = 0 : i64, scratch_operands = 0 : i64, tpu.core_type = #tpu.core_type<tc>, window_params = [{transform_indices = @transform_0, window_bounds = array<i64: 2, 2, 64>}, {pipeline_mode = #tpu.pipeline_mode<synchronous>, transform_indices = @transform_1, window_bounds = array<i64: 64, 128>}, {pipeline_mode = #tpu.pipeline_mode<synchronous>, transform_indices = @transform_2, window_bounds = array<i64: 1, 128>}, {pipeline_mode = #tpu.pipeline_mode<synchronous>, transform_indices = @transform_3, window_bounds = array<i64: 64, 64>}, {pipeline_mode = #tpu.pipeline_mode<synchronous>, transform_indices = @transform_4, window_bounds = array<i64: 1, 64>}, {pipeline_mode = #tpu.pipeline_mode<synchronous>, transform_indices = @transform_5, window_bounds = array<i64: 1, 64>}, {pipeline_mode = #tpu.pipeline_mode<synchronous>, transform_indices = @transform_6, window_bounds = array<i64: 1, 1>}, {transform_indices = @transform_7, window_bounds = array<i64: 2, 1>}, {transform_indices = @transform_8, window_bounds = array<i64: 2, 2, 2, 64>}]} {
    %c0 = arith.constant 0 : index
    %c0_0 = arith.constant 0 : index
    %c0_1 = arith.constant 0 : index
    %0 = vector.load %arg1[%c0, %c0_0, %c0_1] : memref<2x2x64xbf16, #tpu.memory_space<vmem>>, vector<1x2x64xbf16>
    %1 = vector.shape_cast %0 : vector<1x2x64xbf16> to vector<2x64xbf16>
    %c0_2 = arith.constant 0 : index
    %c0_3 = arith.constant 0 : index
    %2 = vector.load %arg2[%c0_2, %c0_3] : memref<64x128xbf16, #tpu.memory_space<vmem>>, vector<64x128xbf16>
    %cst = arith.constant dense<0.000000e+00> : vector<2x128xf32>
    %3 = tpu.matmul %1, %2, %cst {dimension_numbers = #tpu.dot_dimension_numbers<[1], [0], [0], [1], [0, 0, 1, 1], [], []>} : vector<2x64xbf16>, vector<64x128xbf16>, vector<2x128xf32> -> vector<2x128xf32>
    %c0_4 = arith.constant 0 : index
    %c0_5 = arith.constant 0 : index
    %4 = vector.load %arg3[%c0_4, %c0_5] : memref<1x128xf32, #tpu.memory_space<vmem>>, vector<1x128xf32>
    %5 = vector.broadcast %4 : vector<1x128xf32> to vector<2x128xf32>
    %6 = arith.addf %3, %5 : vector<2x128xf32>
    %7 = vector.extract_strided_slice %6 {offsets = [0, 0], sizes = [2, 64], strides = [1, 1]} : vector<2x128xf32> to vector<2x64xf32>
    %8 = vector.extract_strided_slice %6 {offsets = [0, 64], sizes = [2, 64], strides = [1, 1]} : vector<2x128xf32> to vector<2x64xf32>
    %9 = arith.mulf %7, %7 : vector<2x64xf32>
    %10 = arith.mulf %8, %8 : vector<2x64xf32>
    %11 = arith.addf %9, %10 : vector<2x64xf32>
    %cst_6 = arith.constant 1.000000e-24 : f32
    %12 = vector.broadcast %cst_6 : f32 to vector<2x64xf32>
    %13 = arith.maximumf %11, %12 : vector<2x64xf32>
    %14 = math.rsqrt %13 : vector<2x64xf32>
    %15 = arith.mulf %7, %14 : vector<2x64xf32>
    %c0_7 = arith.constant 0 : index
    %c0_8 = arith.constant 0 : index
    %c0_9 = arith.constant 0 : index
    %c0_10 = arith.constant 0 : index
    %16 = vector.load %arg9[%c0_7, %c0_8, %c0_9, %c0_10] : memref<2x2x2x64xf32, #tpu.memory_space<vmem>>, vector<1x1x2x64xf32>
    %17 = vector.shape_cast %16 : vector<1x1x2x64xf32> to vector<2x64xf32>
    %18 = vector.shape_cast %15 : vector<2x64xf32> to vector<1x1x2x64xf32>
    tpu.vector_store %arg9[%c0_7, %c0_8, %c0_9, %c0_10], %18 {strides = array<i32>} : memref<2x2x2x64xf32, #tpu.memory_space<vmem>>, vector<1x1x2x64xf32>,
    %19 = arith.mulf %8, %14 : vector<2x64xf32>
    %c0_11 = arith.constant 0 : index
    %c1 = arith.constant 1 : index
    %c0_12 = arith.constant 0 : index
    %c0_13 = arith.constant 0 : index
    %20 = vector.load %arg9[%c0_11, %c1, %c0_12, %c0_13] : memref<2x2x2x64xf32, #tpu.memory_space<vmem>>, vector<1x1x2x64xf32>
    %21 = vector.shape_cast %20 : vector<1x1x2x64xf32> to vector<2x64xf32>
    %22 = vector.shape_cast %19 : vector<2x64xf32> to vector<1x1x2x64xf32>
    tpu.vector_store %arg9[%c0_11, %c1, %c0_12, %c0_13], %22 {strides = array<i32>} : memref<2x2x2x64xf32, #tpu.memory_space<vmem>>, vector<1x1x2x64xf32>,
    %c1_14 = arith.constant 1 : index
    %c0_15 = arith.constant 0 : index
    %c0_16 = arith.constant 0 : index
    %23 = vector.load %arg1[%c1_14, %c0_15, %c0_16] : memref<2x2x64xbf16, #tpu.memory_space<vmem>>, vector<1x2x64xbf16>
    %24 = vector.shape_cast %23 : vector<1x2x64xbf16> to vector<2x64xbf16>
    %c0_17 = arith.constant 0 : index
    %c0_18 = arith.constant 0 : index
    %25 = vector.load %arg2[%c0_17, %c0_18] : memref<64x128xbf16, #tpu.memory_space<vmem>>, vector<64x128xbf16>
    %cst_19 = arith.constant dense<0.000000e+00> : vector<2x128xf32>
    %26 = tpu.matmul %24, %25, %cst_19 {dimension_numbers = #tpu.dot_dimension_numbers<[1], [0], [0], [1], [0, 0, 1, 1], [], []>} : vector<2x64xbf16>, vector<64x128xbf16>, vector<2x128xf32> -> vector<2x128xf32>
    %c0_20 = arith.constant 0 : index
    %c0_21 = arith.constant 0 : index
    %27 = vector.load %arg3[%c0_20, %c0_21] : memref<1x128xf32, #tpu.memory_space<vmem>>, vector<1x128xf32>
    %28 = vector.broadcast %27 : vector<1x128xf32> to vector<2x128xf32>
    %29 = arith.addf %26, %28 : vector<2x128xf32>
    %30 = vector.extract_strided_slice %29 {offsets = [0, 0], sizes = [2, 64], strides = [1, 1]} : vector<2x128xf32> to vector<2x64xf32>
    %31 = vector.extract_strided_slice %29 {offsets = [0, 64], sizes = [2, 64], strides = [1, 1]} : vector<2x128xf32> to vector<2x64xf32>
    %32 = arith.mulf %30, %30 : vector<2x64xf32>
    %33 = arith.mulf %31, %31 : vector<2x64xf32>
    %34 = arith.addf %32, %33 : vector<2x64xf32>
    %cst_22 = arith.constant 1.000000e-24 : f32
    %35 = vector.broadcast %cst_22 : f32 to vector<2x64xf32>
    %36 = arith.maximumf %34, %35 : vector<2x64xf32>
    %37 = math.rsqrt %36 : vector<2x64xf32>
    %38 = arith.mulf %30, %37 : vector<2x64xf32>
    %c1_23 = arith.constant 1 : index
    %c0_24 = arith.constant 0 : index
    %c0_25 = arith.constant 0 : index
    %c0_26 = arith.constant 0 : index
    %39 = vector.load %arg9[%c1_23, %c0_24, %c0_25, %c0_26] : memref<2x2x2x64xf32, #tpu.memory_space<vmem>>, vector<1x1x2x64xf32>
    %40 = vector.shape_cast %39 : vector<1x1x2x64xf32> to vector<2x64xf32>
    %41 = vector.shape_cast %38 : vector<2x64xf32> to vector<1x1x2x64xf32>
    tpu.vector_store %arg9[%c1_23, %c0_24, %c0_25, %c0_26], %41 {strides = array<i32>} : memref<2x2x2x64xf32, #tpu.memory_space<vmem>>, vector<1x1x2x64xf32>,
    %42 = arith.mulf %31, %37 : vector<2x64xf32>
    %c1_27 = arith.constant 1 : index
    %c1_28 = arith.constant 1 : index
    %c0_29 = arith.constant 0 : index
    %c0_30 = arith.constant 0 : index
    %43 = vector.load %arg9[%c1_27, %c1_28, %c0_29, %c0_30] : memref<2x2x2x64xf32, #tpu.memory_space<vmem>>, vector<1x1x2x64xf32>
    %44 = vector.shape_cast %43 : vector<1x1x2x64xf32> to vector<2x64xf32>
    %45 = vector.shape_cast %42 : vector<2x64xf32> to vector<1x1x2x64xf32>
    tpu.vector_store %arg9[%c1_27, %c1_28, %c0_29, %c0_30], %45 {strides = array<i32>} : memref<2x2x2x64xf32, #tpu.memory_space<vmem>>, vector<1x1x2x64xf32>,
    %46 = arith.mulf %15, %38 : vector<2x64xf32>
    %47 = arith.mulf %19, %42 : vector<2x64xf32>
    %48 = arith.addf %46, %47 : vector<2x64xf32>
    %49 = arith.truncf %48 : vector<2x64xf32> to vector<2x64xbf16>
    %c0_31 = arith.constant 0 : index
    %c0_32 = arith.constant 0 : index
    %50 = vector.load %arg4[%c0_31, %c0_32] : memref<64x64xbf16, #tpu.memory_space<vmem>>, vector<64x64xbf16>
    %cst_33 = arith.constant dense<0.000000e+00> : vector<2x64xf32>
    %51 = tpu.matmul %49, %50, %cst_33 {dimension_numbers = #tpu.dot_dimension_numbers<[1], [0], [0], [1], [0, 0, 1, 1], [], []>} : vector<2x64xbf16>, vector<64x64xbf16>, vector<2x64xf32> -> vector<2x64xf32>
    %c0_34 = arith.constant 0 : index
    %c0_35 = arith.constant 0 : index
    %52 = vector.load %arg5[%c0_34, %c0_35] : memref<1x64xf32, #tpu.memory_space<vmem>>, vector<1x64xf32>
    %53 = vector.broadcast %52 : vector<1x64xf32> to vector<2x64xf32>
    %54 = arith.addf %51, %53 : vector<2x64xf32>
    %cst_36 = arith.constant 0.000000e+00 : f32
    %55 = vector.broadcast %cst_36 : f32 to vector<2x64xf32>
    %56 = arith.maximumf %54, %55 : vector<2x64xf32>
    %c0_37 = arith.constant 0 : index
    %c0_38 = arith.constant 0 : index
    %57 = vector.load %arg6[%c0_37, %c0_38] : memref<1x64xf32, #tpu.memory_space<vmem>>, vector<1x64xf32>
    %58 = vector.broadcast %57 : vector<1x64xf32> to vector<2x64xf32>
    %59 = arith.mulf %56, %58 : vector<2x64xf32>
    %cst_39 = arith.constant dense<0.000000e+00> : vector<2xf32>
    %60 = vector.multi_reduction <add>, %59, %cst_39 [1] : vector<2x64xf32> to vector<2xf32>
    %61 = vector.shape_cast %60 : vector<2xf32> to vector<2x1xf32>
    %c0_40 = arith.constant 0 : index
    %c0_41 = arith.constant 0 : index
    %62 = vector.load %arg7[%c0_40, %c0_41] : memref<1x1xf32, #tpu.memory_space<vmem>>, vector<1x1xf32>
    %63 = vector.broadcast %62 : vector<1x1xf32> to vector<2x1xf32>
    %64 = arith.addf %61, %63 : vector<2x1xf32>
    %c0_42 = arith.constant 0 : index
    %c0_43 = arith.constant 0 : index
    %65 = vector.load %arg8[%c0_42, %c0_43] : memref<2x1xf32, #tpu.memory_space<vmem>>, vector<2x1xf32>
    tpu.vector_store %arg8[%c0_42, %c0_43], %64 {strides = array<i32>} : memref<2x1xf32, #tpu.memory_space<vmem>>, vector<2x1xf32>,
    return
  }
  func.func @transform_0(%arg0: i32) -> (i32, i32, i32) {
    %c0_i32 = arith.constant 0 : i32
    %c0_i32_0 = arith.constant 0 : i32
    %c0_i32_1 = arith.constant 0 : i32
    return %c0_i32, %arg0, %c0_i32_0 : i32, i32, i32
  }
  func.func @transform_1(%arg0: i32) -> (i32, i32) {
    %c0_i32 = arith.constant 0 : i32
    %c0_i32_0 = arith.constant 0 : i32
    %c0_i32_1 = arith.constant 0 : i32
    return %c0_i32, %c0_i32_0 : i32, i32
  }
  func.func @transform_2(%arg0: i32) -> (i32, i32) {
    %c0_i32 = arith.constant 0 : i32
    %c0_i32_0 = arith.constant 0 : i32
    %c0_i32_1 = arith.constant 0 : i32
    return %c0_i32, %c0_i32_0 : i32, i32
  }
  func.func @transform_3(%arg0: i32) -> (i32, i32) {
    %c0_i32 = arith.constant 0 : i32
    %c0_i32_0 = arith.constant 0 : i32
    %c0_i32_1 = arith.constant 0 : i32
    return %c0_i32, %c0_i32_0 : i32, i32
  }
  func.func @transform_4(%arg0: i32) -> (i32, i32) {
    %c0_i32 = arith.constant 0 : i32
    %c0_i32_0 = arith.constant 0 : i32
    %c0_i32_1 = arith.constant 0 : i32
    return %c0_i32, %c0_i32_0 : i32, i32
  }
  func.func @transform_5(%arg0: i32) -> (i32, i32) {
    %c0_i32 = arith.constant 0 : i32
    %c0_i32_0 = arith.constant 0 : i32
    %c0_i32_1 = arith.constant 0 : i32
    return %c0_i32, %c0_i32_0 : i32, i32
  }
  func.func @transform_6(%arg0: i32) -> (i32, i32) {
    %c0_i32 = arith.constant 0 : i32
    %c0_i32_0 = arith.constant 0 : i32
    %c0_i32_1 = arith.constant 0 : i32
    return %c0_i32, %c0_i32_0 : i32, i32
  }
  func.func @transform_7(%arg0: i32) -> (i32, i32) {
    %c0_i32 = arith.constant 0 : i32
    %c0_i32_0 = arith.constant 0 : i32
    return %arg0, %c0_i32 : i32, i32
  }
  func.func @transform_8(%arg0: i32) -> (i32, i32, i32, i32) {
    %c0_i32 = arith.constant 0 : i32
    %c0_i32_0 = arith.constant 0 : i32
    %c0_i32_1 = arith.constant 0 : i32
    %c0_i32_2 = arith.constant 0 : i32
    return %c0_i32, %c0_i32_0, %arg0, %c0_i32_1 : i32, i32, i32, i32
  }
}

</mosaic_0001>

<llo_original>
// kernel: _lambda_.3
$region0: #{_lambda_.3}
  #allocation0 [shape = 'u32[]', space=smem, size = 0x4, offset = 0x4, fixed_abs, tag = 'smem constant byte address 0x4 - core index']
  #allocation1 [shape = 'u32[72,128]{1,0:T(1,128)}', space=vmem, size = 0x9000, scoped, tag = 'internal scratch']
  %s0 = inlined_call_operand.vmem [shape: bf16[256,9], index: 0, kind: input, shape index: {}]
  %s1 = inlined_call_operand.vmem [shape: bf16[9,16], index: 1, kind: input, shape index: {}]
  %s2 = inlined_call_operand.vmem [shape: f32[1,16], index: 2, kind: input, shape index: {}]
  %s3 = inlined_call_operand.vmem [shape: bf16[256,16], index: 3, kind: output, shape index: {}]
  %s4 = sld [smem:[#allocation0]]
  $region45: #{_lambda_.3} parent=0
    _
  %s6 = ssub.s32 1, %s4
  %s7 = scalar_select 0, %s6, %s4
  loop: start=0, step=1, limit=4
  $region2: #{_lambda_.3} parent=0 // loop_pre_header
    _
  $region3: #{_lambda_.3} parent=0 // loop_header
    %s9 = sphi 0, %s13
    %p10 = scmp.ge.s32.totalorder %s9, 4
    %s19 = sphi 0, %s21
    %s22 = sphi 0, %s19
    %s23 = sphi 0, %s22
    %s39 = sphi 0, %s23
    %s43 = sphi 0, %s43
    %s45 = sphi 0, %s43
    %s46 = sphi 0, %s45
    %s60 = sphi 0, %s46
    %s64 = sphi 0, %s64
    %s66 = sphi 0, %s64
    %s67 = sphi 0, %s66
    %s81 = sphi 0, %s67
    %s87 = sphi 0, %s89
    %s90 = sphi 0, %s87
    %s91 = sphi 0, %s90
    %s107 = sphi 0, %s91
  $region4: #{_lambda_.3} parent=0 // loop_header_branch
    %12 = sbr.rel (%p10) target = $region8
  $region5: #{_lambda_.3} parent=0 // loop_body
    %s14 = ssub.s32 %s9, 1
    %s15 = ssub.s32 %s9, 2
    %s16 = sadd.s32 %s9, 1
    %s17 = ssub.s32 %s9, %s16
    %p18 = scmp.eq.s32.totalorder %s17, 0
    %s20 = sadd.s32 %s19, 1
    %s21 = scalar_select %p18, %s19, %s20
    %p24 = pneg %p18
    %p25 = scmp.eq.s32.totalorder %s9, 1
    %p26 = por %p24, %p25
    %p27 = scmp.ne.s32.totalorder %s19, %s22
    %p28 = scmp.eq.s32.totalorder %s9, 0
    %p29 = por %p27, %p28
    %p30 = scmp.ne.s32.totalorder %s19, %s22
    %p31 = scmp.eq.s32.totalorder %s14, 1
    %p32 = por %p30, %p31
    %p33 = scmp.ne.s32.totalorder %s22, %s23
    %p34 = scmp.eq.s32.totalorder %s14, 0
    %p35 = por %p33, %p34
    %p36 = scmp.ne.s32.totalorder %s22, %s23
    %p37 = scmp.eq.s32.totalorder %s15, 1
    %p38 = por %p36, %p37
    %p40 = scmp.ne.s32.totalorder %s23, %s39
    %p41 = scmp.eq.s32.totalorder %s15, 0
    %p42 = por %p40, %p41
    %s44 = sadd.s32 %s43, 1
    %p47 = scmp.eq.s32.totalorder %s9, 1
    %p48 = scmp.ne.s32.totalorder %s43, %s45
    %p49 = scmp.eq.s32.totalorder %s9, 0
    %p50 = por %p48, %p49
    %p51 = scmp.ne.s32.totalorder %s43, %s45
    %p52 = scmp.eq.s32.totalorder %s14, 1
    %p53 = por %p51, %p52
    %p54 = scmp.ne.s32.totalorder %s45, %s46
    %p55 = scmp.eq.s32.totalorder %s14, 0
    %p56 = por %p54, %p55
    %p57 = scmp.ne.s32.totalorder %s45, %s46
    %p58 = scmp.eq.s32.totalorder %s15, 1
    %p59 = por %p57, %p58
    %p61 = scmp.ne.s32.totalorder %s46, %s60
    %p62 = scmp.eq.s32.totalorder %s15, 0
    %p63 = por %p61, %p62
    %s65 = sadd.s32 %s64, 1
    %p68 = scmp.eq.s32.totalorder %s9, 1
    %p69 = scmp.ne.s32.totalorder %s64, %s66
    %p70 = scmp.eq.s32.totalorder %s9, 0
    %p71 = por %p69, %p70
    %p72 = scmp.ne.s32.totalorder %s64, %s66
    %p73 = scmp.eq.s32.totalorder %s14, 1
    %p74 = por %p72, %p73
    %p75 = scmp.ne.s32.totalorder %s66, %s67
    %p76 = scmp.eq.s32.totalorder %s14, 0
    %p77 = por %p75, %p76
    %p78 = scmp.ne.s32.totalorder %s66, %s67
    %p79 = scmp.eq.s32.totalorder %s15, 1
    %p80 = por %p78, %p79
    %p82 = scmp.ne.s32.totalorder %s67, %s81
    %p83 = scmp.eq.s32.totalorder %s15, 0
    %p84 = por %p82, %p83
    %s85 = ssub.s32 %s9, %s16
    %p86 = scmp.eq.s32.totalorder %s85, 0
    %s88 = sadd.s32 %s87, 1
    %s89 = scalar_select %p86, %s87, %s88
    %p92 = pneg %p86
    %p93 = scmp.eq.s32.totalorder %s9, 1
    %p94 = por %p92, %p93
    %p95 = scmp.ne.s32.totalorder %s87, %s90
    %p96 = scmp.eq.s32.totalorder %s9, 0
    %p97 = por %p95, %p96
    %p98 = scmp.ne.s32.totalorder %s87, %s90
    %p99 = scmp.eq.s32.totalorder %s14, 1
    %p100 = por %p98, %p99
    %p101 = scmp.ne.s32.totalorder %s90, %s91
    %p102 = scmp.eq.s32.totalorder %s14, 0
    %p103 = por %p101, %p102
    %p104 = scmp.ne.s32.totalorder %s90, %s91
    %p105 = scmp.eq.s32.totalorder %s15, 1
    %p106 = por %p104, %p105
    %p108 = scmp.ne.s32.totalorder %s91, %s107
    %p109 = scmp.eq.s32.totalorder %s15, 0
    %p110 = por %p108, %p109
    %p111 = scmp.le.s32.totalorder 1, %s9
    %p112 = scmp.lt.s32.totalorder %s9, 3
    %p113 = pnand %p111, %p112
    %p114 = pneg %p113
    // Predicated region
    $region9: #{_lambda_.3} parent=5 // pred_check
      _
    $region10: #{_lambda_.3} parent=5 // pred_check_branch
      %116 = sbr.rel (%p113) target = $region12
    $region11: #{_lambda_.3} parent=5 // pred_region
      %s117 = ssub.s32 %s9, 1
      // Predicated region
      $region13: #{_lambda_.3} parent=11 // pred_check
        %p118 = pneg %p56
      $region14: #{_lambda_.3} parent=11 // pred_check_branch
        %120 = sbr.rel (%p118) target = $region16
      $region15: #{_lambda_.3} parent=11 // pred_region
        _
      $region16: #{_lambda_.3} parent=11 // pred_fallthru
        _
      // Predicated region
      $region17: #{_lambda_.3} parent=11 // pred_check
        %p121 = pneg %p77
      $region18: #{_lambda_.3} parent=11 // pred_check_branch
        %123 = sbr.rel (%p121) target = $region20
      $region19: #{_lambda_.3} parent=11 // pred_region
        _
      $region20: #{_lambda_.3} parent=11 // pred_fallthru
        _
    $region12: #{_lambda_.3} parent=5 // pred_fallthru
      _
    %p124 = scmp.lt.s32.totalorder %s9, 2
    // Predicated region
    $region21: #{_lambda_.3} parent=5 // pred_check
      %p125 = pneg %p124
    $region22: #{_lambda_.3} parent=5 // pred_check_branch
      %127 = sbr.rel (%p125) target = $region24
    $region23: #{_lambda_.3} parent=5 // pred_region
      // Predicated region
      $region25: #{_lambda_.3} parent=23 // pred_check
        %p128 = pneg %p29
      $region26: #{_lambda_.3} parent=23 // pred_check_branch
        %130 = sbr.rel (%p128) target = $region28
      $region27: #{_lambda_.3} parent=23 // pred_region
        %s131 = smul.u32 16, %s9
        %p132 = scmp.lt.s32.totalorder %s131, 31
        %s133 = scalar_select %p132, %s131, 31
        %s134 = smul.addr %s133, 4
        %s135 = scalar_lea.vmem %s0, %s134
        %s136 = smul.u32 16, %s9
      $region28: #{_lambda_.3} parent=23 // pred_fallthru
        _
    $region24: #{_lambda_.3} parent=5 // pred_fallthru
      _
    %p137 = scmp.le.s32.totalorder 1, %s9
    %p138 = scmp.lt.s32.totalorder %s9, 3
    %p139 = pnand %p137, %p138
    %p140 = pneg %p139
    // Predicated region
    $region29: #{_lambda_.3} parent=5 // pred_check
      _
    $region30: #{_lambda_.3} parent=5 // pred_check_branch
      %142 = sbr.rel (%p139) target = $region32
    $region31: #{_lambda_.3} parent=5 // pred_region
      %s143 = ssub.s32 %s9, 1
      %s144 = smul.u32 16, %s14
      %p145 = scmp.lt.s32.totalorder %s144, 31
      %s146 = scalar_select %p145, %s144, 31
      %s147 = smul.addr %s146, 4
      %s148 = scalar_lea.vmem %s0, %s147
      %p149 = pneg %p35
      %p150 = pneg %p32
      %p151 = pneg %p56
      %p152 = pneg %p53
      %p153 = pneg %p77
      %p154 = pneg %p74
      %p155 = pneg %p103
      %p156 = pneg %p100
      %s157 = smul.u32 16, %s14
      %p158 = scmp.lt.s32.totalorder %s157, 31
      %s159 = scalar_select %p158, %s157, 31
      %s160 = smul.addr %s159, 4
      %s161 = scalar_lea.vmem %s3, %s160
      %s162 = smul.u32 16, %s14
      %p163 = scmp.lt.s32.totalorder %s162, 31
      %s164 = scalar_select %p163, %s162, 31
      %s165 = smul.addr %s164, 4
      %s166 = scalar_lea.vmem %s0, %s165
      %s167 = smul.u32 16, %s14
      %s168 = smul.u32 16, %s14
      %p169 = scmp.lt.s32.totalorder %s168, 31
      %s170 = scalar_select %p169, %s168, 31
      %s171 = smul.addr %s170, 4
      %s172 = scalar_lea.vmem %s3, %s171
      %s173 = smul.u32 16, %s14
      %v175 = vld [vmem:[%s166] sm:$0xf]
      %v176 = vld [vmem:[%s166 + $0x4] sm:$0xf]
      %v177 = vld [vmem:[%s166 + $0x8] sm:$0xf]
      %v178 = vld [vmem:[%s166 + $0xc] sm:$0xf]
      %v179 = vld [vmem:[%s166 + $0x10] sm:$0xf]
      %v180 = vld [vmem:[%s166 + $0x14] sm:$0xf]
      %v181 = vld [vmem:[%s166 + $0x18] sm:$0xf]
      %v182 = vld [vmem:[%s166 + $0x1c] sm:$0xf]
      %v183 = vld [vmem:[%s166 + $0x20] sm:$0xf]
      %v184 = vld [vmem:[%s166 + $0x24] sm:$0xf]
      %v185 = vld [vmem:[%s166 + $0x28] sm:$0xf]
      %v186 = vld [vmem:[%s166 + $0x2c] sm:$0xf]
      %v187 = vld [vmem:[%s166 + $0x30] sm:$0xf]
      %v188 = vld [vmem:[%s166 + $0x34] sm:$0xf]
      %v189 = vld [vmem:[%s166 + $0x38] sm:$0xf]
      %v190 = vld [vmem:[%s166 + $0x3c] sm:$0xf]
      %v191 = vld [vmem:[%s1] sm:$0xf]
      %v192 = vld [vmem:[%s1 + $0x4] sm:$0x1]
      %v193 = vld [vmem:[%s2] sm:$0x1]
      %v195 = vperm.slane %v193, 0
      %v213 = vunpack.c.l.b16 %v175
      %v214 = vunpack.c.l.b16 %v176
      %v215 = vunpack.c.l.b16 %v177
      %v216 = vunpack.c.l.b16 %v178
      %v217 = vunpack.c.l.b16 %v179
      %v218 = vunpack.c.l.b16 %v180
      %v219 = vunpack.c.l.b16 %v181
      %v220 = vunpack.c.l.b16 %v182
      %v221 = vunpack.c.l.b16 %v183
      %v222 = vunpack.c.l.b16 %v184
      %v223 = vunpack.c.l.b16 %v185
      %v224 = vunpack.c.l.b16 %v186
      %v225 = vunpack.c.l.b16 %v187
      %v226 = vunpack.c.l.b16 %v188
      %v227 = vunpack.c.l.b16 %v189
      %v228 = vunpack.c.l.b16 %v190
      %v229 = vpack.c.b16 %v214, %v213
      %v230 = vpack.c.b16 %v216, %v215
      %v231 = vpack.c.b16 %v218, %v217
      %v232 = vpack.c.b16 %v220, %v219
      %v233 = vpack.c.b16 %v222, %v221
      %v234 = vpack.c.b16 %v224, %v223
      %v235 = vpack.c.b16 %v226, %v225
      %v236 = vpack.c.b16 %v228, %v227
      %v239 = vunpack.c.l.b16 %v191
      %v240 = vunpack.c.l.b16 %v192
      %v241 = vpack.c.b16 %v240, %v239
      %vm242 = vcmask 72704
      %v244 = vsel %vm242, %v229, 0
      %v247 = vsel %vm242, %v230, 0
      %v250 = vsel %vm242, %v231, 0
      %v253 = vsel %vm242, %v232, 0
      %v256 = vsel %vm242, %v233, 0
      %v259 = vsel %vm242, %v234, 0
      %v262 = vsel %vm242, %v235, 0
      %v265 = vsel %vm242, %v236, 0
      %vm267 = vcmask 1043456
      %vm268 = vcmask 1044480
      %v269 = vsel %vm267, 4294967295, 65535
      %v270 = vsel %vm268, %v269, 0
      %v272 = vand.u32 %v241, %v270
      %274 = vmatpush.bf16.msra.mxu0 0
      %275 = vmatpush.bf16.msra.mxu0 0
      %276 = vmatpush.bf16.msra.mxu0 0
      %277 = vmatpush.bf16.msra.mxu0 0
      %278 = vmatpush.bf16.msra.mxu0 0
      %279 = vmatpush.bf16.msra.mxu0 0
      %280 = vmatpush.bf16.msra.mxu0 0
      %281 = vmatpush.bf16.msra.mxu0 %v272
      %282 = vmatmul.bf16.gmra.mxu0 %v244
      %v283 = vpop.f32.mrf.mxu0
      %v284 = vadd.f32 %v195, %v283
      %v285 = vpop.f32.mrf.mxu0
      %v286 = vadd.f32 %v195, %v285
      %287 = vmatmul.bf16.gmra.mxu0 %v247
      %v288 = vpop.f32.mrf.mxu0
      %v289 = vadd.f32 %v195, %v288
      %v290 = vpop.f32.mrf.mxu0
      %v291 = vadd.f32 %v195, %v290
      %292 = vmatmul.bf16.gmra.mxu0 %v250
      %v293 = vpop.f32.mrf.mxu0
      %v294 = vadd.f32 %v195, %v293
      %v295 = vpop.f32.mrf.mxu0
      %v296 = vadd.f32 %v195, %v295
      %297 = vmatmul.bf16.gmra.mxu0 %v253
      %v298 = vpop.f32.mrf.mxu0
      %v299 = vadd.f32 %v195, %v298
      %v300 = vpop.f32.mrf.mxu0
      %v301 = vadd.f32 %v195, %v300
      %302 = vmatmul.bf16.gmra.mxu0 %v256
      %v303 = vpop.f32.mrf.mxu0
      %v304 = vadd.f32 %v195, %v303
      %v305 = vpop.f32.mrf.mxu0
      %v306 = vadd.f32 %v195, %v305
      %307 = vmatmul.bf16.gmra.mxu0 %v259
      %v308 = vpop.f32.mrf.mxu0
      %v309 = vadd.f32 %v195, %v308
      %v310 = vpop.f32.mrf.mxu0
      %v311 = vadd.f32 %v195, %v310
      %312 = vmatmul.bf16.gmra.mxu0 %v262
      %v313 = vpop.f32.mrf.mxu0
      %v314 = vadd.f32 %v195, %v313
      %v315 = vpop.f32.mrf.mxu0
      %v316 = vadd.f32 %v195, %v315
      %317 = vmatmul.bf16.gmra.mxu0 %v265
      %v318 = vpop.f32.mrf.mxu0
      %v319 = vadd.f32 %v195, %v318
      %v320 = vpop.f32.mrf.mxu0
      %v321 = vadd.f32 %v195, %v320
      %322 = vdwg.mxu0
      %v323 = vmax.f32 %v284, 0.0
      %v324 = vmax.f32 %v286, 0.0
      %v325 = vmax.f32 %v289, 0.0
      %v326 = vmax.f32 %v291, 0.0
      %v327 = vmax.f32 %v294, 0.0
      %v328 = vmax.f32 %v296, 0.0
      %v329 = vmax.f32 %v299, 0.0
      %v330 = vmax.f32 %v301, 0.0
      %v331 = vmax.f32 %v304, 0.0
      %v332 = vmax.f32 %v306, 0.0
      %v333 = vmax.f32 %v309, 0.0
      %v334 = vmax.f32 %v311, 0.0
      %v335 = vmax.f32 %v314, 0.0
      %v336 = vmax.f32 %v316, 0.0
      %v337 = vmax.f32 %v319, 0.0
      %v338 = vmax.f32 %v321, 0.0
      %v339 = vpack.c.bf16 %v323, %v323
      %v340 = vpack.c.bf16 %v324, %v324
      %v341 = vpack.c.bf16 %v325, %v325
      %v342 = vpack.c.bf16 %v326, %v326
      %v343 = vpack.c.bf16 %v327, %v327
      %v344 = vpack.c.bf16 %v328, %v328
      %v345 = vpack.c.bf16 %v329, %v329
      %v346 = vpack.c.bf16 %v330, %v330
      %v347 = vpack.c.bf16 %v331, %v331
      %v348 = vpack.c.bf16 %v332, %v332
      %v349 = vpack.c.bf16 %v333, %v333
      %v350 = vpack.c.bf16 %v334, %v334
      %v351 = vpack.c.bf16 %v335, %v335
      %v352 = vpack.c.bf16 %v336, %v336
      %v353 = vpack.c.bf16 %v337, %v337
      %v354 = vpack.c.bf16 %v338, %v338
      %vm355 = vcmask 125952
      %356 = vst.msk [vmem:[%s172] sm:$0xf] %vm355, %v339
      %357 = vst.msk [vmem:[%s172 + $0x4] sm:$0xf] %vm355, %v340
      %358 = vst.msk [vmem:[%s172 + $0x8] sm:$0xf] %vm355, %v341
      %359 = vst.msk [vmem:[%s172 + $0xc] sm:$0xf] %vm355, %v342
      %360 = vst.msk [vmem:[%s172 + $0x10] sm:$0xf] %vm355, %v343
      %361 = vst.msk [vmem:[%s172 + $0x14] sm:$0xf] %vm355, %v344
      %362 = vst.msk [vmem:[%s172 + $0x18] sm:$0xf] %vm355, %v345
      %363 = vst.msk [vmem:[%s172 + $0x1c] sm:$0xf] %vm355, %v346
      %364 = vst.msk [vmem:[%s172 + $0x20] sm:$0xf] %vm355, %v347
      %365 = vst.msk [vmem:[%s172 + $0x24] sm:$0xf] %vm355, %v348
      %366 = vst.msk [vmem:[%s172 + $0x28] sm:$0xf] %vm355, %v349
      %367 = vst.msk [vmem:[%s172 + $0x2c] sm:$0xf] %vm355, %v350
      %368 = vst.msk [vmem:[%s172 + $0x30] sm:$0xf] %vm355, %v351
      %369 = vst.msk [vmem:[%s172 + $0x34] sm:$0xf] %vm355, %v352
      %370 = vst.msk [vmem:[%s172 + $0x38] sm:$0xf] %vm355, %v353
      %371 = vst.msk [vmem:[%s172 + $0x3c] sm:$0xf] %vm355, %v354
      %s372 = smul.u32 16, %s14
      %p373 = scmp.lt.s32.totalorder %s372, 31
      %s374 = scalar_select %p373, %s372, 31
      %s375 = smul.addr %s374, 4
      %s376 = scalar_lea.vmem %s3, %s375
      // Predicated region
      $region33: #{_lambda_.3} parent=31 // pred_check
        %p377 = pneg %p100
      $region34: #{_lambda_.3} parent=31 // pred_check_branch
        %379 = sbr.rel (%p377) target = $region36
      $region35: #{_lambda_.3} parent=31 // pred_region
        %s380 = smul.u32 16, %s14
      $region36: #{_lambda_.3} parent=31 // pred_fallthru
        _
    $region32: #{_lambda_.3} parent=5 // pred_fallthru
      _
    %p381 = scmp.le.s32.totalorder 2, %s9
    // Predicated region
    $region37: #{_lambda_.3} parent=5 // pred_check
      %p382 = pneg %p381
    $region38: #{_lambda_.3} parent=5 // pred_check_branch
      %384 = sbr.rel (%p382) target = $region40
    $region39: #{_lambda_.3} parent=5 // pred_region
      %s385 = ssub.s32 %s9, 2
      // Predicated region
      $region41: #{_lambda_.3} parent=39 // pred_check
        %p386 = pneg %p106
      $region42: #{_lambda_.3} parent=39 // pred_check_branch
        %388 = sbr.rel (%p386) target = $region44
      $region43: #{_lambda_.3} parent=39 // pred_region
        %s389 = smul.u32 16, %s15
        %p390 = scmp.lt.s32.totalorder %s389, 31
        %s391 = scalar_select %p390, %s389, 31
        %s392 = smul.addr %s391, 4
        %s393 = scalar_lea.vmem %s3, %s392
      $region44: #{_lambda_.3} parent=39 // pred_fallthru
        _
    $region40: #{_lambda_.3} parent=5 // pred_fallthru
      _
  $region6: #{_lambda_.3} parent=0 // loop_footer
    %s13 = sadd.s32 1, %s9
  $region7: #{_lambda_.3} parent=0 // loop_footer_branch
    %8 = sbr.rel target = $region3
  $region8: #{_lambda_.3} parent=0 // loop_exit
    _

// kernel: _lambda_.4
$region0: #{_lambda_.4}
  #allocation0 [shape = 'u32[]', space=smem, size = 0x4, offset = 0x4, fixed_abs, tag = 'smem constant byte address 0x4 - core index']
  #allocation1 [shape = 'u32[72,128]{1,0:T(1,128)}', space=vmem, size = 0x9000, scoped, tag = 'internal scratch']
  %s0 = inlined_call_operand.vmem [shape: bf16[64,144], index: 0, kind: input, shape index: {}]
  %s1 = inlined_call_operand.vmem [shape: bf16[144,32], index: 1, kind: input, shape index: {}]
  %s2 = inlined_call_operand.vmem [shape: f32[1,32], index: 2, kind: input, shape index: {}]
  %s3 = inlined_call_operand.vmem [shape: f32[32,64], index: 3, kind: input, shape index: {}]
  %s4 = inlined_call_operand.vmem [shape: f32[1,64], index: 4, kind: input, shape index: {}]
  %s5 = inlined_call_operand.vmem [shape: f32[4,64], index: 5, kind: output, shape index: {}]
  %s6 = sld [smem:[#allocation0]]
  $region30: #{_lambda_.4} parent=0
    _
  %s8 = ssub.s32 1, %s6
  %s9 = scalar_select 0, %s8, %s6
  // Predicated region
  $region2: #{_lambda_.4} parent=0 // pred_check
    _
  $region3: #{_lambda_.4} parent=0 // pred_check_branch
    %11 = sbr.rel (0) target = $region5
  $region4: #{_lambda_.4} parent=0 // pred_region
    _
  $region5: #{_lambda_.4} parent=0 // pred_fallthru
    _
  // Predicated region
  $region6: #{_lambda_.4} parent=0 // pred_check
    _
  $region7: #{_lambda_.4} parent=0 // pred_check_branch
    %13 = sbr.rel (0) target = $region9
  $region8: #{_lambda_.4} parent=0 // pred_region
    _
  $region9: #{_lambda_.4} parent=0 // pred_fallthru
    _
  // Predicated region
  $region10: #{_lambda_.4} parent=0 // pred_check
    _
  $region11: #{_lambda_.4} parent=0 // pred_check_branch
    %15 = sbr.rel (0) target = $region13
  $region12: #{_lambda_.4} parent=0 // pred_region
    _
  $region13: #{_lambda_.4} parent=0 // pred_fallthru
    _
  // Predicated region
  $region14: #{_lambda_.4} parent=0 // pred_check
    _
  $region15: #{_lambda_.4} parent=0 // pred_check_branch
    %17 = sbr.rel (0) target = $region17
  $region16: #{_lambda_.4} parent=0 // pred_region
    _
  $region17: #{_lambda_.4} parent=0 // pred_fallthru
    _
  // Predicated region
  $region18: #{_lambda_.4} parent=0 // pred_check
    _
  $region19: #{_lambda_.4} parent=0 // pred_check_branch
    %19 = sbr.rel (0) target = $region21
  $region20: #{_lambda_.4} parent=0 // pred_region
    _
  $region21: #{_lambda_.4} parent=0 // pred_fallthru
    _
  %v21 = vld [vmem:[%s0] sm:$0xff]
  %v22 = vld [vmem:[%s0 + $0x8] sm:$0xff]
  %v23 = vld [vmem:[%s0 + $0x10] sm:$0xff]
  %v24 = vld [vmem:[%s0 + $0x18] sm:$0xff]
  %v25 = vld [vmem:[%s0 + $0x20] sm:$0xff]
  %v26 = vld [vmem:[%s0 + $0x28] sm:$0xff]
  %v27 = vld [vmem:[%s0 + $0x30] sm:$0xff]
  %v28 = vld [vmem:[%s0 + $0x38] sm:$0xff]
  %v29 = vld [vmem:[%s1] sm:$0xf]
  %v30 = vld [vmem:[%s1 + $0x4] sm:$0xf]
  %v31 = vld [vmem:[%s1 + $0x8] sm:$0xf]
  %v32 = vld [vmem:[%s1 + $0xc] sm:$0xf]
  %v33 = vld [vmem:[%s1 + $0x10] sm:$0xf]
  %v34 = vld [vmem:[%s1 + $0x14] sm:$0xf]
  %v35 = vld [vmem:[%s1 + $0x18] sm:$0xf]
  %v36 = vld [vmem:[%s1 + $0x1c] sm:$0xf]
  %v37 = vld [vmem:[%s1 + $0x20] sm:$0xf]
  %v38 = vld [vmem:[%s1 + $0x24] sm:$0xf]
  %v39 = vld [vmem:[%s1 + $0x28] sm:$0xf]
  %v40 = vld [vmem:[%s1 + $0x2c] sm:$0xf]
  %v41 = vld [vmem:[%s1 + $0x30] sm:$0xf]
  %v42 = vld [vmem:[%s1 + $0x34] sm:$0xf]
  %v43 = vld [vmem:[%s1 + $0x38] sm:$0xf]
  %v44 = vld [vmem:[%s1 + $0x3c] sm:$0xf]
  %v45 = vld [vmem:[%s1 + $0x40] sm:$0xf]
  %v46 = vld [vmem:[%s1 + $0x44] sm:$0xf]
  %v47 = vld [vmem:[%s2] sm:$0x1]
  %v49 = vperm.slane %v47, 0
  %v59 = vunpack.c.l.b16 %v21
  %v60 = vunpack.c.h.b16 %v21
  %v61 = vunpack.c.l.b16 %v22
  %v62 = vunpack.c.h.b16 %v22
  %v63 = vunpack.c.l.b16 %v23
  %v64 = vunpack.c.h.b16 %v23
  %v65 = vunpack.c.l.b16 %v24
  %v66 = vunpack.c.h.b16 %v24
  %v67 = vunpack.c.l.b16 %v25
  %v68 = vunpack.c.h.b16 %v25
  %v69 = vunpack.c.l.b16 %v26
  %v70 = vunpack.c.h.b16 %v26
  %v71 = vunpack.c.l.b16 %v27
  %v72 = vunpack.c.h.b16 %v27
  %v73 = vunpack.c.l.b16 %v28
  %v74 = vunpack.c.h.b16 %v28
  %v75 = vpack.c.b16 %v61, %v59
  %v76 = vpack.c.b16 %v62, %v60
  %v77 = vpack.c.b16 %v65, %v63
  %v78 = vpack.c.b16 %v66, %v64
  %v79 = vpack.c.b16 %v69, %v67
  %v80 = vpack.c.b16 %v70, %v68
  %v81 = vpack.c.b16 %v73, %v71
  %v82 = vpack.c.b16 %v74, %v72
  %v105 = vunpack.c.l.b16 %v29
  %v106 = vunpack.c.l.b16 %v30
  %v107 = vunpack.c.l.b16 %v31
  %v108 = vunpack.c.l.b16 %v32
  %v109 = vunpack.c.l.b16 %v33
  %v110 = vunpack.c.l.b16 %v34
  %v111 = vunpack.c.l.b16 %v35
  %v112 = vunpack.c.l.b16 %v36
  %v113 = vunpack.c.l.b16 %v37
  %v114 = vunpack.c.l.b16 %v38
  %v115 = vunpack.c.l.b16 %v39
  %v116 = vunpack.c.l.b16 %v40
  %v117 = vunpack.c.l.b16 %v41
  %v118 = vunpack.c.l.b16 %v42
  %v119 = vunpack.c.l.b16 %v43
  %v120 = vunpack.c.l.b16 %v44
  %v121 = vunpack.c.l.b16 %v45
  %v122 = vunpack.c.l.b16 %v46
  %v123 = vpack.c.b16 %v106, %v105
  %v124 = vpack.c.b16 %v108, %v107
  %v125 = vpack.c.b16 %v110, %v109
  %v126 = vpack.c.b16 %v112, %v111
  %v127 = vpack.c.b16 %v114, %v113
  %v128 = vpack.c.b16 %v116, %v115
  %v129 = vpack.c.b16 %v118, %v117
  %v130 = vpack.c.b16 %v120, %v119
  %v131 = vpack.c.b16 %v122, %v121
  %vm141 = vcmask 130048
  %v143 = vsel %vm141, %v76, 0
  %v146 = vsel %vm141, %v78, 0
  %v149 = vsel %vm141, %v80, 0
  %v152 = vsel %vm141, %v82, 0
  %154 = vmatpush.bf16.msra.mxu0 %v130
  %155 = vmatpush.bf16.msra.mxu0 %v129
  %156 = vmatpush.bf16.msra.mxu0 %v128
  %157 = vmatpush.bf16.msra.mxu0 %v127
  %158 = vmatpush.bf16.msra.mxu0 %v126
  %159 = vmatpush.bf16.msra.mxu0 %v125
  %160 = vmatpush.bf16.msra.mxu0 %v124
  %161 = vmatpush.bf16.msra.mxu0 %v123
  %162 = vmatmul.bf16.gmra.mxu0 %v75
  %v163 = vpop.f32.mrf.mxu0
  %v164 = vadd.f32 %v49, %v163
  %v165 = vpop.f32.mrf.mxu0
  %v166 = vadd.f32 %v49, %v165
  %167 = vmatmul.bf16.gmra.mxu0 %v77
  %v168 = vpop.f32.mrf.mxu0
  %v169 = vadd.f32 %v49, %v168
  %v170 = vpop.f32.mrf.mxu0
  %v171 = vadd.f32 %v49, %v170
  %172 = vmatmul.bf16.gmra.mxu0 %v79
  %v173 = vpop.f32.mrf.mxu0
  %v174 = vadd.f32 %v49, %v173
  %v175 = vpop.f32.mrf.mxu0
  %v176 = vadd.f32 %v49, %v175
  %177 = vmatmul.bf16.gmra.mxu0 %v81
  %v178 = vpop.f32.mrf.mxu0
  %v179 = vadd.f32 %v49, %v178
  %v180 = vpop.f32.mrf.mxu0
  %v181 = vadd.f32 %v49, %v180
  %182 = vdwg.mxu0
  %183 = vmatpush.bf16.msra.mxu0 0
  %184 = vmatpush.bf16.msra.mxu0 0
  %185 = vmatpush.bf16.msra.mxu0 0
  %186 = vmatpush.bf16.msra.mxu0 0
  %187 = vmatpush.bf16.msra.mxu0 0
  %188 = vmatpush.bf16.msra.mxu0 0
  %189 = vmatpush.bf16.msra.mxu0 0
  %190 = vmatpush.bf16.msra.mxu0 %v131
  %191 = vmatmul.bf16.gmra.mxu0 %v143
  %v192 = vpop.f32.mrf.mxu0
  %v193 = vadd.f32 %v164, %v192
  %v194 = vpop.f32.mrf.mxu0
  %v195 = vadd.f32 %v166, %v194
  %196 = vmatmul.bf16.gmra.mxu0 %v146
  %v197 = vpop.f32.mrf.mxu0
  %v198 = vadd.f32 %v169, %v197
  %v199 = vpop.f32.mrf.mxu0
  %v200 = vadd.f32 %v171, %v199
  %201 = vmatmul.bf16.gmra.mxu0 %v149
  %v202 = vpop.f32.mrf.mxu0
  %v203 = vadd.f32 %v174, %v202
  %v204 = vpop.f32.mrf.mxu0
  %v205 = vadd.f32 %v176, %v204
  %206 = vmatmul.bf16.gmra.mxu0 %v152
  %v207 = vpop.f32.mrf.mxu0
  %v208 = vadd.f32 %v179, %v207
  %v209 = vpop.f32.mrf.mxu0
  %v210 = vadd.f32 %v181, %v209
  %211 = vdwg.mxu0
  %v212 = vmax.f32 %v193, 0.0
  %v213 = vmax.f32 %v195, 0.0
  %v214 = vmax.f32 %v198, 0.0
  %v215 = vmax.f32 %v200, 0.0
  %v216 = vmax.f32 %v203, 0.0
  %v217 = vmax.f32 %v205, 0.0
  %v218 = vmax.f32 %v208, 0.0
  %v219 = vmax.f32 %v210, 0.0
  %vm220 = vcmask 261120
  %v221 = vsel %vm220, %v212, 0.0
  %v222 = vsel %vm220, %v213, 0.0
  %v223 = vadd.f32 %v221, %v222
  %v224 = vrot.slane %v223, 4
  %v225 = vadd.f32 %v223, %v224
  %v226 = vrot.slane %v225, 2
  %v227 = vadd.f32 %v225, %v226
  %v228 = vrot.slane %v227, 1
  %v229 = vadd.f32 %v227, %v228
  %v230 = vsel %vm220, %v214, 0.0
  %v231 = vsel %vm220, %v215, 0.0
  %v232 = vadd.f32 %v230, %v231
  %v233 = vrot.slane %v232, 4
  %v234 = vadd.f32 %v232, %v233
  %v235 = vrot.slane %v234, 2
  %v236 = vadd.f32 %v234, %v235
  %v237 = vrot.slane %v236, 1
  %v238 = vadd.f32 %v236, %v237
  %v239 = vsel %vm220, %v216, 0.0
  %v240 = vsel %vm220, %v217, 0.0
  %v241 = vadd.f32 %v239, %v240
  %v242 = vrot.slane %v241, 4
  %v243 = vadd.f32 %v241, %v242
  %v244 = vrot.slane %v243, 2
  %v245 = vadd.f32 %v243, %v244
  %v246 = vrot.slane %v245, 1
  %v247 = vadd.f32 %v245, %v246
  %v248 = vsel %vm220, %v218, 0.0
  %v249 = vsel %vm220, %v219, 0.0
  %v250 = vadd.f32 %v248, %v249
  %v251 = vrot.slane %v250, 4
  %v252 = vadd.f32 %v250, %v251
  %v253 = vrot.slane %v252, 2
  %v254 = vadd.f32 %v252, %v253
  %v255 = vrot.slane %v254, 1
  %v256 = vadd.f32 %v254, %v255
  %v257 = vmul.f32 %v229, 0.0625
  %v258 = vmul.f32 %v238, 0.0625
  %v259 = vmul.f32 %v247, 0.0625
  %v260 = vmul.f32 %v256, 0.0625
  %v261 = vld [vmem:[%s3] sm:$0xff]
  %v262 = vld [vmem:[%s3 + $0x8] sm:$0xff]
  %v263 = vld [vmem:[%s3 + $0x10] sm:$0xff]
  %v264 = vld [vmem:[%s3 + $0x18] sm:$0xff]
  %v265 = vld [vmem:[%s4] sm:$0x1]
  %v267 = vperm.slane %v265, 0
  %vm273 = vcmask 1041409
  %v274 = vsel %vm273, %v258, %v257
  %vm275 = vcmask 1042434
  %v276 = vsel %vm275, %v259, %v274
  %vm277 = vcmask 1043459
  %v278 = vsel %vm277, %v260, %v276
  %v279 = vsel %vm220, %v278, 0
  %281 = vmatpush.msra.mxu0 0.0
  %282 = vmatpush.msra.mxu0 0.0
  %283 = vmatpush.msra.mxu0 0.0
  %284 = vmatpush.msra.mxu0 0.0
  %285 = vmatpush.msra.mxu0 0.0
  %286 = vmatpush.msra.mxu0 0.0
  %287 = vmatpush.msra.mxu0 0.0
  %288 = vmatpush.msra.mxu0 0.0
  %289 = vmatpush.msra.mxu0 0.0
  %290 = vmatpush.msra.mxu0 0.0
  %291 = vmatpush.msra.mxu0 0.0
  %292 = vmatpush.msra.mxu0 0.0
  %293 = vmatpush.msra.mxu0 %v264
  %294 = vmatpush.msra.mxu0 %v263
  %295 = vmatpush.msra.mxu0 %v262
  %296 = vmatpush.msra.mxu0 %v261
  %297 = vmatmul.f32.gmra.mxu0 %v279
  %v298 = vpop.f32.mrf.mxu0
  %v299 = vadd.f32 %v267, %v298
  %300 = vdwg.mxu0
  %vm301 = vcmask 519168
  %302 = vst.msk [vmem:[%s5] sm:$0xf] %vm301, %v299
  // Predicated region
  $region22: #{_lambda_.4} parent=0 // pred_check
    _
  $region23: #{_lambda_.4} parent=0 // pred_check_branch
    %304 = sbr.rel (0) target = $region25
  $region24: #{_lambda_.4} parent=0 // pred_region
    _
  $region25: #{_lambda_.4} parent=0 // pred_fallthru
    _
  // Predicated region
  $region26: #{_lambda_.4} parent=0 // pred_check
    _
  $region27: #{_lambda_.4} parent=0 // pred_check_branch
    %306 = sbr.rel (0) target = $region29
  $region28: #{_lambda_.4} parent=0 // pred_region
    _
  $region29: #{_lambda_.4} parent=0 // pred_fallthru
    _

// kernel: _lambda_.5
$region0: #{_lambda_.5}
  #allocation0 [shape = 'u32[]', space=smem, size = 0x4, offset = 0x4, fixed_abs, tag = 'smem constant byte address 0x4 - core index']
  #allocation1 [shape = 'u32[72,128]{1,0:T(1,128)}', space=vmem, size = 0x9000, scoped, tag = 'internal scratch']
  #allocation2 [shape = 'f32[1,1]{1,0:T(1,128)S(1)}', space=vmem, size = 0x200, scoped, tag = 'scoped memory for _lambda_.5']
  %s0 = inlined_call_operand.vmem [shape: bf16[2,2,64], index: 0, kind: input, shape index: {}]
  %s1 = inlined_call_operand.vmem [shape: bf16[64,128], index: 1, kind: input, shape index: {}]
  %s2 = inlined_call_operand.vmem [shape: f32[1,128], index: 2, kind: input, shape index: {}]
  %s3 = inlined_call_operand.vmem [shape: bf16[64,64], index: 3, kind: input, shape index: {}]
  %s4 = inlined_call_operand.vmem [shape: f32[1,64], index: 4, kind: input, shape index: {}]
  %s5 = inlined_call_operand.vmem [shape: f32[1,64], index: 5, kind: input, shape index: {}]
  %s6 = inlined_call_operand.<no memory space> [shape: f32[1,1], index: 6, kind: input, shape index: {}]
  %s7 = inlined_call_operand.vmem [shape: f32[2,1], index: 7, kind: output, shape index: {0}]
  %s8 = inlined_call_operand.vmem [shape: f32[2,2,2,64], index: 8, kind: output, shape index: {1}]
  %9 = xla_tuple %s7, %s8
  %s10 = sld [smem:[#allocation0]]
  $region46: #{_lambda_.5} parent=0
    _
  %s12 = ssub.s32 1, %s10
  %s13 = scalar_select 0, %s12, %s10
  %v14 = vstv %s6
  %15 = vst [vmem:[#allocation2] sm:$0x1] %v14
  // Predicated region
  $region2: #{_lambda_.5} parent=0 // pred_check
    _
  $region3: #{_lambda_.5} parent=0 // pred_check_branch
    %17 = sbr.rel (0) target = $region5
  $region4: #{_lambda_.5} parent=0 // pred_region
    _
  $region5: #{_lambda_.5} parent=0 // pred_fallthru
    _
  // Predicated region
  $region6: #{_lambda_.5} parent=0 // pred_check
    _
  $region7: #{_lambda_.5} parent=0 // pred_check_branch
    %19 = sbr.rel (0) target = $region9
  $region8: #{_lambda_.5} parent=0 // pred_region
    _
  $region9: #{_lambda_.5} parent=0 // pred_fallthru
    _
  // Predicated region
  $region10: #{_lambda_.5} parent=0 // pred_check
    _
  $region11: #{_lambda_.5} parent=0 // pred_check_branch
    %21 = sbr.rel (0) target = $region13
  $region12: #{_lambda_.5} parent=0 // pred_region
    _
  $region13: #{_lambda_.5} parent=0 // pred_fallthru
    _
  // Predicated region
  $region14: #{_lambda_.5} parent=0 // pred_check
    _
  $region15: #{_lambda_.5} parent=0 // pred_check_branch
    %23 = sbr.rel (0) target = $region17
  $region16: #{_lambda_.5} parent=0 // pred_region
    _
  $region17: #{_lambda_.5} parent=0 // pred_fallthru
    _
  // Predicated region
  $region18: #{_lambda_.5} parent=0 // pred_check
    _
  $region19: #{_lambda_.5} parent=0 // pred_check_branch
    %25 = sbr.rel (0) target = $region21
  $region20: #{_lambda_.5} parent=0 // pred_region
    _
  $region21: #{_lambda_.5} parent=0 // pred_fallthru
    _
  // Predicated region
  $region22: #{_lambda_.5} parent=0 // pred_check
    _
  $region23: #{_lambda_.5} parent=0 // pred_check_branch
    %27 = sbr.rel (0) target = $region25
  $region24: #{_lambda_.5} parent=0 // pred_region
    _
  $region25: #{_lambda_.5} parent=0 // pred_fallthru
    _
  // Predicated region
  $region26: #{_lambda_.5} parent=0 // pred_check
    _
  $region27: #{_lambda_.5} parent=0 // pred_check_branch
    %29 = sbr.rel (0) target = $region29
  $region28: #{_lambda_.5} parent=0 // pred_region
    _
  $region29: #{_lambda_.5} parent=0 // pred_fallthru
    _
  %v31 = vld [vmem:[%s0] sm:$0x1]
  %v32 = vld [vmem:[%s1] sm:$0xf]
  %v33 = vld [vmem:[%s1 + $0x4] sm:$0xf]
  %v34 = vld [vmem:[%s1 + $0x8] sm:$0xf]
  %v35 = vld [vmem:[%s1 + $0xc] sm:$0xf]
  %v36 = vld [vmem:[%s1 + $0x10] sm:$0xf]
  %v37 = vld [vmem:[%s1 + $0x14] sm:$0xf]
  %v38 = vld [vmem:[%s1 + $0x18] sm:$0xf]
  %v39 = vld [vmem:[%s1 + $0x1c] sm:$0xf]
  %v40 = vld [vmem:[%s2] sm:$0x1]
  %v42 = vperm.slane %v40, 0
  %v52 = vunpack.c.l.b16 %v32
  %v53 = vunpack.c.l.b16 %v33
  %v54 = vunpack.c.l.b16 %v34
  %v55 = vunpack.c.l.b16 %v35
  %v56 = vunpack.c.l.b16 %v36
  %v57 = vunpack.c.l.b16 %v37
  %v58 = vunpack.c.l.b16 %v38
  %v59 = vunpack.c.l.b16 %v39
  %v60 = vpack.c.b16 %v53, %v52
  %v61 = vpack.c.b16 %v55, %v54
  %v62 = vpack.c.b16 %v57, %v56
  %v63 = vpack.c.b16 %v59, %v58
  %vm68 = vcmask 523264
  %v70 = vsel %vm68, %v31, 0
  %72 = vmatpush.bf16.msra.mxu0 0
  %73 = vmatpush.bf16.msra.mxu0 0
  %74 = vmatpush.bf16.msra.mxu0 0
  %75 = vmatpush.bf16.msra.mxu0 0
  %76 = vmatpush.bf16.msra.mxu0 %v63
  %77 = vmatpush.bf16.msra.mxu0 %v62
  %78 = vmatpush.bf16.msra.mxu0 %v61
  %79 = vmatpush.bf16.msra.mxu0 %v60
  %80 = vmatmul.bf16.gmra.mxu0 %v70
  %v81 = vpop.f32.mrf.mxu0
  %v82 = vadd.f32 %v42, %v81
  %v83 = vpop.f32.mrf.mxu0
  %84 = vdwg.mxu0
  %v85 = vmul.f32 %v82, %v82
  %87 = vrot.lane.b32.xlu0 %v85, 64
  %v88 = vpop.permute.xlu0 %87
  %v90 = vadd.f32 %v85, %v88
  %v91 = vmax.f32 %v90, 1e-24
  %v92 = vrsqrt.pop %v91
  %v93 = vmul.f32 %v92, %v91
  %v94 = vmul.f32 %v93, %v92
  %v95 = vmul.f32 0.5, %v94
  %v96 = vsub.f32 1.5, %v95
  %v97 = vmul.f32 %v92, %v96
  %vm98 = vweird.f32 %v91
  %vm99 = vweird.f32 %v92
  %vm100 = vmor %vm98, %vm99
  %v101 = vsel %vm100, %v92, %v97
  %v102 = vmul.f32 %v82, %v101
  %vm103 = vcmask 517120
  %104 = vst.msk [vmem:[%s8] sm:$0x3] %vm103, %v102
  %106 = vrot.lane.b32.xlu0 %v101, 64
  %v107 = vpop.permute.xlu0 %106
  %v109 = vmul.f32 %v82, %v107
  %111 = vrot.lane.b32.xlu0 %v109, 64
  %v112 = vpop.permute.xlu0 %111
  %s114 = scalar_lea.vmem %s8, 2
  %115 = vst.msk [vmem:[%s114] sm:$0x3] %vm103, %v112
  %s116 = scalar_lea.vmem %s0, 1
  %v117 = vld [vmem:[%s116] sm:$0x1]
  %v118 = vld [vmem:[%s1] sm:$0xf]
  %v119 = vld [vmem:[%s1 + $0x4] sm:$0xf]
  %v120 = vld [vmem:[%s1 + $0x8] sm:$0xf]
  %v121 = vld [vmem:[%s1 + $0xc] sm:$0xf]
  %v122 = vld [vmem:[%s1 + $0x10] sm:$0xf]
  %v123 = vld [vmem:[%s1 + $0x14] sm:$0xf]
  %v124 = vld [vmem:[%s1 + $0x18] sm:$0xf]
  %v125 = vld [vmem:[%s1 + $0x1c] sm:$0xf]
  %v126 = vld [vmem:[%s2] sm:$0x1]
  %v128 = vperm.slane %v126, 0
  %v138 = vunpack.c.l.b16 %v118
  %v139 = vunpack.c.l.b16 %v119
  %v140 = vunpack.c.l.b16 %v120
  %v141 = vunpack.c.l.b16 %v121
  %v142 = vunpack.c.l.b16 %v122
  %v143 = vunpack.c.l.b16 %v123
  %v144 = vunpack.c.l.b16 %v124
  %v145 = vunpack.c.l.b16 %v125
  %v146 = vpack.c.b16 %v139, %v138
  %v147 = vpack.c.b16 %v141, %v140
  %v148 = vpack.c.b16 %v143, %v142
  %v149 = vpack.c.b16 %v145, %v144
  %v155 = vsel %vm68, %v117, 0
  %157 = vmatpush.bf16.msra.mxu0 0
  %158 = vmatpush.bf16.msra.mxu0 0
  %159 = vmatpush.bf16.msra.mxu0 0
  %160 = vmatpush.bf16.msra.mxu0 0
  %161 = vmatpush.bf16.msra.mxu0 %v149
  %162 = vmatpush.bf16.msra.mxu0 %v148
  %163 = vmatpush.bf16.msra.mxu0 %v147
  %164 = vmatpush.bf16.msra.mxu0 %v146
  %165 = vmatmul.bf16.gmra.mxu0 %v155
  %v166 = vpop.f32.mrf.mxu0
  %v167 = vadd.f32 %v128, %v166
  %v168 = vpop.f32.mrf.mxu0
  %169 = vdwg.mxu0
  %v170 = vmul.f32 %v167, %v167
  %172 = vrot.lane.b32.xlu0 %v170, 64
  %v173 = vpop.permute.xlu0 %172
  %v175 = vadd.f32 %v170, %v173
  %v176 = vmax.f32 %v175, 1e-24
  %v177 = vrsqrt.pop %v176
  %v178 = vmul.f32 %v177, %v176
  %v179 = vmul.f32 %v178, %v177
  %v180 = vmul.f32 0.5, %v179
  %v181 = vsub.f32 1.5, %v180
  %v182 = vmul.f32 %v177, %v181
  %vm183 = vweird.f32 %v176
  %vm184 = vweird.f32 %v177
  %vm185 = vmor %vm183, %vm184
  %v186 = vsel %vm185, %v177, %v182
  %v187 = vmul.f32 %v167, %v186
  %s188 = scalar_lea.vmem %s8, 4
  %189 = vst.msk [vmem:[%s188] sm:$0x3] %vm103, %v187
  %191 = vrot.lane.b32.xlu0 %v186, 64
  %v192 = vpop.permute.xlu0 %191
  %v194 = vmul.f32 %v167, %v192
  %196 = vrot.lane.b32.xlu0 %v194, 64
  %v197 = vpop.permute.xlu0 %196
  %s199 = scalar_lea.vmem %s8, 6
  %200 = vst.msk [vmem:[%s199] sm:$0x3] %vm103, %v197
  %v201 = vmul.f32 %v102, %v187
  %v202 = vmul.f32 %v109, %v194
  %204 = vrot.lane.b32.xlu0 %v202, 64
  %v205 = vpop.permute.xlu0 %204
  %v207 = vadd.f32 %v201, %v205
  %v208 = vpack.c.bf16 %v207, %v207
  %v209 = vld [vmem:[%s3] sm:$0xf]
  %v210 = vld [vmem:[%s3 + $0x4] sm:$0xf]
  %v211 = vld [vmem:[%s3 + $0x8] sm:$0xf]
  %v212 = vld [vmem:[%s3 + $0xc] sm:$0xf]
  %v213 = vld [vmem:[%s3 + $0x10] sm:$0xf]
  %v214 = vld [vmem:[%s3 + $0x14] sm:$0xf]
  %v215 = vld [vmem:[%s3 + $0x18] sm:$0xf]
  %v216 = vld [vmem:[%s3 + $0x1c] sm:$0xf]
  %v217 = vld [vmem:[%s4] sm:$0x1]
  %v219 = vperm.slane %v217, 0
  %v229 = vunpack.c.l.b16 %v209
  %v230 = vunpack.c.l.b16 %v210
  %v231 = vunpack.c.l.b16 %v211
  %v232 = vunpack.c.l.b16 %v212
  %v233 = vunpack.c.l.b16 %v213
  %v234 = vunpack.c.l.b16 %v214
  %v235 = vunpack.c.l.b16 %v215
  %v236 = vunpack.c.l.b16 %v216
  %v237 = vpack.c.b16 %v230, %v229
  %v238 = vpack.c.b16 %v232, %v231
  %v239 = vpack.c.b16 %v234, %v233
  %v240 = vpack.c.b16 %v236, %v235
  %v246 = vsel %vm68, %v208, 0
  %248 = vmatpush.bf16.msra.mxu0 0
  %249 = vmatpush.bf16.msra.mxu0 0
  %250 = vmatpush.bf16.msra.mxu0 0
  %251 = vmatpush.bf16.msra.mxu0 0
  %252 = vmatpush.bf16.msra.mxu0 %v240
  %253 = vmatpush.bf16.msra.mxu0 %v239
  %254 = vmatpush.bf16.msra.mxu0 %v238
  %255 = vmatpush.bf16.msra.mxu0 %v237
  %256 = vmatmul.bf16.gmra.mxu0 %v246
  %v257 = vpop.f32.mrf.mxu0
  %v258 = vadd.f32 %v219, %v257
  %v259 = vpop.f32.mrf.mxu0
  %260 = vdwg.mxu0
  %v261 = vmax.f32 %v258, 0.0
  %v262 = vld [vmem:[%s5] sm:$0x1]
  %v264 = vperm.slane %v262, 0
  %v266 = vmul.f32 %v261, %v264
  %v267 = vsel %vm103, %v266, 0.0
  %268 = vadd.xlane.f32.xlu0 %v267
  %v269 = vpop.xlane.xlu0 %268
  %v270 = vld [vmem:[#allocation2] sm:$0x1]
  %v272 = vperm.slane %v270, 0
  %v274 = vadd.f32 %v269, %v272
  %vm275 = vcmask 1024
  %276 = vst.msk [vmem:[%s7] sm:$0x3] %vm275, %v274
  // Predicated region
  $region30: #{_lambda_.5} parent=0 // pred_check
    _
  $region31: #{_lambda_.5} parent=0 // pred_check_branch
    %278 = sbr.rel (0) target = $region33
  $region32: #{_lambda_.5} parent=0 // pred_region
    _
  $region33: #{_lambda_.5} parent=0 // pred_fallthru
    _
  // Predicated region
  $region34: #{_lambda_.5} parent=0 // pred_check
    _
  $region35: #{_lambda_.5} parent=0 // pred_check_branch
    %280 = sbr.rel (0) target = $region37
  $region36: #{_lambda_.5} parent=0 // pred_region
    _
  $region37: #{_lambda_.5} parent=0 // pred_fallthru
    _
  // Predicated region
  $region38: #{_lambda_.5} parent=0 // pred_check
    _
  $region39: #{_lambda_.5} parent=0 // pred_check_branch
    %282 = sbr.rel (0) target = $region41
  $region40: #{_lambda_.5} parent=0 // pred_region
    _
  $region41: #{_lambda_.5} parent=0 // pred_fallthru
    _
  // Predicated region
  $region42: #{_lambda_.5} parent=0 // pred_check
    _
  $region43: #{_lambda_.5} parent=0 // pred_check_branch
    %284 = sbr.rel (0) target = $region45
  $region44: #{_lambda_.5} parent=0 // pred_region
    _
  $region45: #{_lambda_.5} parent=0 // pred_fallthru
    _

</llo_original>
